<compile_context>
chip_gen: v7x
topology: tpu7x:2x2x1
jax: 0.10.0
libtpu: 0.0.40
codegen_flags: <defaults>
</compile_context>

<pallas_src>
import functools

import jax
import jax.numpy as jnp
from jax import lax
from jax.experimental import pallas as pl
from jax.experimental.pallas import tpu as pltpu


def _round_up(v, m):
    return ((v + m - 1) // m) * m


def _default_tile_n():
    """Generation-dependent node-tile default: bigger tiles on v6e/v7x to amortize
    the ~0.35 us per-grid-step overhead against their higher HBM bandwidth."""
    try:
        kind = jax.devices()[0].device_kind.lower()
    except Exception:
        kind = ""
    if "v5" in kind:
        return 512
    return 1024


def _pick_tile_f(f, max_tf):
    """Feature tile: full F when small / non-128-aligned; otherwise a 128-multiple divisor,
    capped so that F >= 256 yields at least 2 tiles (megacore F-sharding on v7x)."""
    if f % 128 != 0 or f <= 128:
        return f
    cap = min(max_tf, f // 2) if f >= 256 else max_tf
    cap = max(128, (cap // 128) * 128)
    for tf in range(cap, 127, -128):
        if f % tf == 0:
            return tf
    return f


def _vmem_limit_bytes(tile_n, tile_f, acc_rows, itemsize):
    est = (2 * tile_n * max(tile_f, 128) * itemsize   # double-buffered x tiles
           + 2 * acc_rows * max(tile_f, 128) * 4      # resident f32 accumulator/out
           + 2 * 8 * max(tile_n, 128) * 4             # ids tiles
           + 2 * acc_rows * 128 * 4)                  # inv-count tile
    # 48 MiB cap: safe under v7x's 64 MiB physical VMEM, plenty on v5e/v6e (128 MiB).
    return int(min(48 * 2**20, max(32 * 2**20, 4 * est)))


def _mean_all_kernel(x_ref, out_ref, *, n_valid, tile_n, ragged):
    """B == 1 (batch=None): running column sum; no one-hot build, no MXU."""
    t = pl.program_id(1)
    last = pl.num_programs(1) - 1

    @pl.when(t == 0)
    def _():
        out_ref[...] = jnp.zeros_like(out_ref)

    def _accum(mask_tail):
        x = x_ref[...].astype(jnp.float32)
        if mask_tail:  # zero garbage rows of the (possibly OOB) last tile
            row = t * tile_n + lax.broadcasted_iota(jnp.int32, (tile_n, 1), 0)
            x = jnp.where(row < n_valid, x, 0.0)
        out_ref[...] += jnp.sum(x, axis=0, keepdims=True)

    if ragged:  # static branch; mask cost paid only on the final node tile
        @pl.when(t != last)
        def _():
            _accum(False)

        @pl.when(t == last)
        def _():
            _accum(True)
    else:
        _accum(False)

    @pl.when(t == last)
    def _():
        out_ref[...] = out_ref[...] * (1.0 / float(n_valid))


def _segment_mean_kernel(ids_ref, inv_cnt_ref, x_ref, out_ref, *,
                         n_valid, tile_n, ragged, b_pad):
    """Segment mean via one-hot matmul; f32 accumulation directly in the resident out block."""
    t = pl.program_id(1)
    last = pl.num_programs(1) - 1

    @pl.when(t == 0)
    def _():
        out_ref[...] = jnp.zeros_like(out_ref)

    ids = ids_ref[...]                                     # (1, tile_n) int32
    seg = lax.broadcasted_iota(jnp.int32, (b_pad, tile_n), 0)
    one_hot = (seg == ids).astype(x_ref.dtype)             # exact 0/1; bf16-native MXU path

    def _accum(mask_tail):
        x = x_ref[...]                                     # (tile_n, tile_f), native dtype
        if mask_tail:  # zero rows past N so OOB garbage (NaN/Inf) never reaches the MXU
            row = t * tile_n + lax.broadcasted_iota(jnp.int32, (tile_n, 1), 0)
            x = jnp.where(row < n_valid, x, jnp.zeros_like(x))
        out_ref[...] += jnp.dot(one_hot, x, preferred_element_type=jnp.float32)

    if ragged:  # static branch; mask cost paid only on the final node tile
        @pl.when(t != last)
        def _():
            _accum(False)

        @pl.when(t == last)
        def _():
            _accum(True)
    else:
        _accum(False)

    @pl.when(t == last)
    def _():
        # inv_cnt precomputed on host (1/max(count,1)); empty segments -> 0, matching PyG.
        out_ref[...] = out_ref[...] * inv_cnt_ref[...]


def avg_readout(x, batch=None, num_segments=None, *, tile_n=None, tile_f=512):
    """Pallas equivalent of AvgReadout.forward (torch_geometric global_mean_pool)."""
    n, f_in = x.shape
    out_dtype = x.dtype

    if tile_n is None:
        tile_n = _default_tile_n()

    # Large unaligned F: pad to a 128-multiple so tiles stay bounded & lane-aligned
    # (avoids a single (tn, F) mega-tile that would blow v7x VMEM / kill F-sharding).
    f = f_in
    if f % 128 != 0 and f > 512:
        f = _round_up(f, 128)
        x = jnp.pad(x, ((0, 0), (0, f - f_in)))

    tf = _pick_tile_f(f, tile_f)
    f_tiles = f // tf

    if batch is not None:
        batch = batch.astype(jnp.int32)
        if num_segments is None:
            # TODO(synk): this forces a host sync / breaks async dispatch; pass a static num_segments.
            num_segments = int(jax.device_get(batch).max()) + 1
        b = int(num_segments)
        b_pad = max(8, _round_up(b, 8))
        # Bound the (b_pad, tile_n) one-hot working set (~256 KiB f32) so large graph
        # counts don't flip the kernel from HBM-bound to VALU/spill-bound.
        tile_n = min(tile_n, max(128, ((65536 // b_pad) // 128) * 128))

    tn = min(_round_up(max(tile_n, 8), 8), _round_up(n, 8))
    if n > tn:  # multi-tile: keep the ids lane dimension 128-aligned
        tn = max(128, (tn // 128) * 128)
    n_tiles = -(-n // tn)
    ragged = (n % tn) != 0

    if batch is None:
        kernel = functools.partial(_mean_all_kernel, n_valid=n, tile_n=tn, ragged=ragged)
        out = pl.pallas_call(
            kernel,
            out_shape=jax.ShapeDtypeStruct((1, f), jnp.float32),
            grid_spec=pltpu.PrefetchScalarGridSpec(
                num_scalar_prefetch=0,
                grid=(f_tiles, n_tiles),            # F parallel (2 TCs on v7x), N reduction last
                in_specs=[pl.BlockSpec((tn, tf), lambda fi, t: (t, fi))],
                out_specs=pl.BlockSpec((1, tf), lambda fi, t: (0, fi)),
            ),
            compiler_params=pltpu.CompilerParams(
                dimension_semantics=("parallel", "arbitrary"),
                vmem_limit_bytes=_vmem_limit_bytes(tn, tf, 8, x.dtype.itemsize),
            ),
        )(x)
        return out[:, :f_in].astype(out_dtype)

    # Only the tiny ids array is padded; x streams unpadded (tail masked in-kernel).
    n_pad = n_tiles * tn
    ids_p = jnp.full((1, n_pad), b_pad, jnp.int32).at[0, :n].set(batch)
    # Per-segment inverse counts computed once on the host; empty segments clamp to 1
    # -> output 0 (matching PyG).  Ids >= num_segments are dropped by the scatter.
    cnt = jnp.zeros((b_pad,), jnp.float32).at[batch].add(1.0)
    inv_cnt = (1.0 / jnp.maximum(cnt, 1.0)).reshape(b_pad, 1)

    kernel = functools.partial(_segment_mean_kernel, n_valid=n, tile_n=tn,
                               ragged=ragged, b_pad=b_pad)
    out = pl.pallas_call(
        kernel,
        out_shape=jax.ShapeDtypeStruct((b_pad, f), jnp.float32),
        grid_spec=pltpu.PrefetchScalarGridSpec(
            num_scalar_prefetch=0,
            grid=(f_tiles, n_tiles),                # F parallel, N reduction last
            in_specs=[
                pl.BlockSpec((1, tn), lambda fi, t: (0, t)),      # segment-id tile
                pl.BlockSpec((b_pad, 1), lambda fi, t: (0, 0)),   # per-segment 1/count
                pl.BlockSpec((tn, tf), lambda fi, t: (t, fi)),    # node-feature tile
            ],
            out_specs=pl.BlockSpec((b_pad, tf), lambda fi, t: (0, fi)),  # resident f32 acc
        ),
        compiler_params=pltpu.CompilerParams(
            dimension_semantics=("parallel", "arbitrary"),
            vmem_limit_bytes=_vmem_limit_bytes(tn, tf, b_pad, x.dtype.itemsize),
        ),
    )(ids_p, inv_cnt, x)
    return out[:b, :f_in].astype(out_dtype)


if __name__ == "__main__":
    key = jax.random.PRNGKey(0)

    # Case 1: module default (batch=None) -> mean over all nodes, shape (1, F)
    n, f = 16, 32
    x = jax.random.normal(key, (n, f), dtype=jnp.float32)
    out_default = jax.block_until_ready(avg_readout(x, batch=None))
    ref_default = jnp.mean(x, axis=0, keepdims=True)
    assert out_default.shape == (1, f)
    assert jnp.allclose(out_default, ref_default, atol=1e-5, rtol=1e-5)

    # Case 2: explicit batch ids -> per-graph means, shape (B, F)
    batch = jnp.array([0] * 6 + [1] * 5 + [2] * 5, dtype=jnp.int32)
    out_seg = jax.block_until_ready(avg_readout(x, batch=batch, num_segments=3))
    ref_seg = jnp.stack([x[batch == i].mean(axis=0) for i in range(3)])
    assert out_seg.shape == (3, f)
    assert jnp.allclose(out_seg, ref_seg, atol=1e-5, rtol=1e-5)

    # Case 3: ragged node count + multiple node tiles + multiple F tiles
    # (exercises the pl.when-gated tail mask and the >=2-F-tile rule)
    n3, f3, b3 = 300, 256, 5
    key1, key2 = jax.random.split(key)
    x3 = jax.random.normal(key1, (n3, f3), dtype=jnp.float32)
    batch3 = jnp.sort(jax.random.randint(key2, (n3,), 0, b3)).astype(jnp.int32)
    out3 = jax.block_until_ready(avg_readout(x3, batch=batch3, num_segments=b3, tile_n=128))
    ref3 = jnp.stack([
        jnp.sum(jnp.where((batch3 == i)[:, None], x3, 0.0), axis=0)
        / jnp.maximum(jnp.sum(batch3 == i), 1)
        for i in range(b3)
    ])
    assert out3.shape == (b3, f3)
    assert jnp.allclose(out3, ref3, atol=1e-4, rtol=1e-4)

    # Case 4: bf16 inputs use the native bf16 MXU path with f32 accumulation
    xb = x3.astype(jnp.bfloat16)
    outb = jax.block_until_ready(avg_readout(xb, batch=batch3, num_segments=b3))
    refb = jnp.stack([
        jnp.sum(jnp.where((batch3 == i)[:, None], xb.astype(jnp.float32), 0.0), axis=0)
        / jnp.maximum(jnp.sum(batch3 == i), 1)
        for i in range(b3)
    ]).astype(jnp.bfloat16)
    assert outb.dtype == jnp.bfloat16 and outb.shape == (b3, f3)
    assert jnp.allclose(outb.astype(jnp.float32), refb.astype(jnp.float32),
                        atol=3e-2, rtol=3e-2)

    print("KERNEL_OK")
</pallas_src>

<mosaic_0001>
module attributes {stable_mosaic.version = 11 : i64} {
  func.func @_mean_all_kernel(%arg0: i32, %arg1: i32, %arg2: memref<16x32xf32, #tpu.memory_space<vmem>>, %arg3: memref<1x32xf32, #tpu.memory_space<vmem>>) attributes {dimension_semantics = [#tpu.dimension_semantics<parallel>, #tpu.dimension_semantics<arbitrary>], iteration_bounds = array<i64: 1, 1>, scalar_prefetch = 0 : i64, scratch_operands = 0 : i64, tpu.core_type = #tpu.core_type<tc>, window_params = [{transform_indices = @transform_0, window_bounds = array<i64: 16, 32>}, {transform_indices = @transform_1, window_bounds = array<i64: 1, 32>}]} {
    %c0_i32 = arith.constant 0 : i32
    %0 = arith.cmpi eq, %arg1, %c0_i32 : i32
    %1 = arith.extui %0 : i1 to i32
    %c0_i32_0 = arith.constant 0 : i32
    %2 = arith.cmpi ne, %1, %c0_i32_0 : i32
    scf.if %2 {
      %cst_8 = arith.constant 0.000000e+00 : f32
      %12 = vector.broadcast %cst_8 : f32 to vector<1x32xf32>
      %c0_9 = arith.constant 0 : index
      %c0_10 = arith.constant 0 : index
      %13 = vector.load %arg3[%c0_9, %c0_10] : memref<1x32xf32, #tpu.memory_space<vmem>>, vector<1x32xf32>
      tpu.vector_store %arg3[%c0_9, %c0_10], %12 {strides = array<i32>} : memref<1x32xf32, #tpu.memory_space<vmem>>, vector<1x32xf32>,
    } else {
    }
    %c0 = arith.constant 0 : index
    %c0_1 = arith.constant 0 : index
    %3 = vector.load %arg2[%c0, %c0_1] : memref<16x32xf32, #tpu.memory_space<vmem>>, vector<16x32xf32>
    %c0_2 = arith.constant 0 : index
    %c0_3 = arith.constant 0 : index
    %4 = vector.load %arg3[%c0_2, %c0_3] : memref<1x32xf32, #tpu.memory_space<vmem>>, vector<1x32xf32>
    %cst = arith.constant dense<0.000000e+00> : vector<32xf32>
    %5 = vector.multi_reduction <add>, %3, %cst [0] : vector<16x32xf32> to vector<32xf32>
    %6 = vector.shape_cast %5 : vector<32xf32> to vector<1x32xf32>
    %7 = arith.addf %4, %6 : vector<1x32xf32>
    %c0_4 = arith.constant 0 : index
    %c0_5 = arith.constant 0 : index
    %8 = vector.load %arg3[%c0_4, %c0_5] : memref<1x32xf32, #tpu.memory_space<vmem>>, vector<1x32xf32>
    tpu.vector_store %arg3[%c0_4, %c0_5], %7 {strides = array<i32>} : memref<1x32xf32, #tpu.memory_space<vmem>>, vector<1x32xf32>,
    %c0_i32_6 = arith.constant 0 : i32
    %9 = arith.cmpi eq, %arg1, %c0_i32_6 : i32
    %10 = arith.extui %9 : i1 to i32
    %c0_i32_7 = arith.constant 0 : i32
    %11 = arith.cmpi ne, %10, %c0_i32_7 : i32
    scf.if %11 {
      %c0_8 = arith.constant 0 : index
      %c0_9 = arith.constant 0 : index
      %12 = vector.load %arg3[%c0_8, %c0_9] : memref<1x32xf32, #tpu.memory_space<vmem>>, vector<1x32xf32>
      %cst_10 = arith.constant 6.250000e-02 : f32
      %13 = vector.broadcast %cst_10 : f32 to vector<1x32xf32>
      %14 = arith.mulf %12, %13 : vector<1x32xf32>
      %c0_11 = arith.constant 0 : index
      %c0_12 = arith.constant 0 : index
      %15 = vector.load %arg3[%c0_11, %c0_12] : memref<1x32xf32, #tpu.memory_space<vmem>>, vector<1x32xf32>
      tpu.vector_store %arg3[%c0_11, %c0_12], %14 {strides = array<i32>} : memref<1x32xf32, #tpu.memory_space<vmem>>, vector<1x32xf32>,
    } else {
    }
    return
  }
  func.func @transform_0(%arg0: i32, %arg1: i32) -> (i32, i32) {
    %c0_i32 = arith.constant 0 : i32
    return %arg1, %arg0 : i32, i32
  }
  func.func @transform_1(%arg0: i32, %arg1: i32) -> (i32, i32) {
    %c0_i32 = arith.constant 0 : i32
    %c0_i32_0 = arith.constant 0 : i32
    return %c0_i32, %arg0 : i32, i32
  }
}

</mosaic_0001>

<llo_original>
// kernel: tpu_custom_call.1
$region0: #{tpu_custom_call.1}
  #allocation0 [shape = 'u32[]', space=smem, size = 0x4, offset = 0x4, fixed_abs, tag = 'smem constant byte address 0x4 - core index']
  #allocation1 [shape = 'u32[144,128]{1,0:T(1,128)}', space=vmem, size = 0x12000, scoped, tag = 'internal scratch']
  %s0 = inlined_call_operand.hbm [shape: f32[16,32], index: 0, kind: input, shape index: {}]
  %s1 = inlined_call_operand.hbm [shape: f32[1,32], index: 1, kind: output, shape index: {}]
  %s2 = sld [smem:[#allocation0]]
  $region26: #{tpu_custom_call.1} parent=0
    _
  %s4 = ssub.s32 1, %s2
  %s5 = scalar_select 0, %s4, %s2
  $region1: #{tpu_custom_call.1} parent=0
    #allocation2 [shape = 'u8[8192]{0}', space=vmem, size = 0x2000, scoped, tag = 'input window, operand 0, single buffered']
    #allocation3 [shape = 's32[1]{0}', space=sflag, size = 0x4, scoped, tag = 'scoped memory for tpu_custom_call.1']
    #allocation4 [shape = 's32[1]{0}', space=sflag, size = 0x4, scoped, tag = 'scoped memory for tpu_custom_call.1']
    #allocation5 [shape = 'u8[512]{0}', space=vmem, size = 0x400, scoped, tag = 'output window, operand 0, single buffered']
    %6 = vsyncpa [#allocation3], 0
    %7 = vsyncpa [#allocation4], 0
    // Predicated region
    $region2: #{tpu_custom_call.1} parent=1 // pred_check
      _
    $region3: #{tpu_custom_call.1} parent=1 // pred_check_branch
      %9 = sbr.rel (0) target = $region5
    $region4: #{tpu_custom_call.1} parent=1 // pred_region
      %s11 = ssub.s32 256, 256
      %12 = vsyncadd [#allocation3], %s11
      %s13 = sshll.u32 [#allocation2], 4
      %s14 = int_to_ptr.vmem [resolvable:$true] %s13
      %19 = dma.hbm_to_vmem [thread:$0]  %s0, 256, %s14, [#allocation3], 128, 128, 8
    $region5: #{tpu_custom_call.1} parent=1 // pred_fallthru
      _
    // Predicated region
    $region6: #{tpu_custom_call.1} parent=1 // pred_check
      _
    $region7: #{tpu_custom_call.1} parent=1 // pred_check_branch
      %21 = sbr.rel (0) target = $region9
    $region8: #{tpu_custom_call.1} parent=1 // pred_region
      %22 = dma.done [#allocation3], 256
    $region9: #{tpu_custom_call.1} parent=1 // pred_fallthru
      _
    %p23 = scmp.eq.s32.totalorder 0, 0
    // Predicated region
    $region10: #{tpu_custom_call.1} parent=1 // pred_check
      %p24 = pneg %p23
    $region11: #{tpu_custom_call.1} parent=1 // pred_check_branch
      %26 = sbr.rel (%p24) target = $region13
    $region12: #{tpu_custom_call.1} parent=1 // pred_region
      %vm27 = vcmask 253952
      %28 = vst.msk [vmem:[#allocation5] sm:$0x1] %vm27, 0.0
    $region13: #{tpu_custom_call.1} parent=1 // pred_fallthru
      _
    %v29 = vld [vmem:[#allocation2] sm:$0xff]
    %v30 = vld [vmem:[#allocation2 + $0x8] sm:$0xff]
    %v31 = vld [vmem:[#allocation5] sm:$0x1]
    %vm32 = vcmask 261120
    %v33 = vsel %vm32, %v29, 0.0
    %v34 = vsel %vm32, %v30, 0.0
    %v35 = vadd.f32 %v33, %v34
    %v36 = vrot.slane %v35, 4
    %v37 = vadd.f32 %v35, %v36
    %v38 = vrot.slane %v37, 2
    %v39 = vadd.f32 %v37, %v38
    %v40 = vrot.slane %v39, 1
    %v41 = vadd.f32 %v39, %v40
    %v42 = vadd.f32 %v31, %v41
    %vm43 = vcmask 253952
    %44 = vst.msk [vmem:[#allocation5] sm:$0x1] %vm43, %v42
    // Predicated region
    $region14: #{tpu_custom_call.1} parent=1 // pred_check
      %p45 = pneg %p23
    $region15: #{tpu_custom_call.1} parent=1 // pred_check_branch
      %47 = sbr.rel (%p45) target = $region17
    $region16: #{tpu_custom_call.1} parent=1 // pred_region
      %v48 = vld [vmem:[#allocation5] sm:$0x1]
      %v49 = vmul.f32 %v48, 0.0625
      %50 = vst.msk [vmem:[#allocation5] sm:$0x1] %vm43, %v49
    $region17: #{tpu_custom_call.1} parent=1 // pred_fallthru
      _
    // Predicated region
    $region18: #{tpu_custom_call.1} parent=1 // pred_check
      _
    $region19: #{tpu_custom_call.1} parent=1 // pred_check_branch
      %52 = sbr.rel (0) target = $region21
    $region20: #{tpu_custom_call.1} parent=1 // pred_region
      %s54 = ssub.s32 16, 16
      %55 = vsyncadd [#allocation4], %s54
      %s57 = sshll.u32 [#allocation5], 4
      %s58 = int_to_ptr.vmem [resolvable:$true] %s57
      %60 = dma.vmem_to_hbm [thread:$0]  %s58, 16, %s1, [#allocation4]
    $region21: #{tpu_custom_call.1} parent=1 // pred_fallthru
      _
    // Predicated region
    $region22: #{tpu_custom_call.1} parent=1 // pred_check
      _
    $region23: #{tpu_custom_call.1} parent=1 // pred_check_branch
      %62 = sbr.rel (0) target = $region25
    $region24: #{tpu_custom_call.1} parent=1 // pred_region
      %63 = dma.done [#allocation4], 16
    $region25: #{tpu_custom_call.1} parent=1 // pred_fallthru
      _
    %64 = vsyncpa [#allocation3], 1
    %65 = vsyncpa [#allocation4], 1

</llo_original>
